<compile_context>
chip_gen: v6e
topology: v6e:2x2x1
jax: 0.10.0
libtpu: 0.0.40
codegen_flags: <defaults>
</compile_context>

<pallas_src>
import jax
import jax.numpy as jnp
from jax import lax
from jax.experimental import pallas as pl
from jax.experimental.pallas import tpu as pltpu


def _round_up(n, m):
    return ((n + m - 1) // m) * m


def _round_down(n, m):
    return (n // m) * m


def mlp_kernel(x_ref, w1_ref, b1_ref, w2_ref, b2_ref, w3_ref, b3_ref, o_ref):
    """Fused 3-layer MLP for one batch tile.

    x_ref : (bt, D)  f32  (cast to the weight dtype in-kernel, right before the MXU)
    w1_ref: (D, 64)  bf16/f32        b1_ref: (1, 64) f32
    w2_ref: (64, 32) bf16/f32        b2_ref: (1, 32) f32
    w3_ref: (1, 32)  f32             b3_ref: (1, 1)  f32
    o_ref : (1, bt)  f32  -- lane-dense output row
    """
    # In-kernel cast (VPU, hidden under the HBM-bound x DMA) replaces the old
    # wrapper-side f32->bf16 HBM pass on x.
    x = x_ref[...].astype(w1_ref.dtype)

    # Layer 1 (MXU), f32 accumulation; bias + ReLU on the f32 accumulator.
    h1 = jnp.dot(x, w1_ref[...], preferred_element_type=jnp.float32) + b1_ref[...]
    h1 = jnp.maximum(h1, 0.0)

    # Layer 2 (MXU), f32 accumulation.
    h2 = jnp.dot(h1.astype(w2_ref.dtype), w2_ref[...],
                 preferred_element_type=jnp.float32) + b2_ref[...]
    h2 = jnp.maximum(h2, 0.0)

    # Layer 3 (32 -> 1) as a (M=1, K=32, N=bt) contraction: result lands directly
    # in the lane-dense (1, bt) layout (full-width vst, no masked column stores).
    # TODO(synk): if pl.lower_as_mlir shows a per-step (bt,32)->(32,bt) XLU relayout
    # of h2 becoming the binding slot, switch to h2 @ w3 plus a (bt,1)->(1,bt)
    # relayout (32x less XLU data), or carry the activations feature-major.
    out_row = lax.dot_general(
        w3_ref[...], h2,
        dimension_numbers=(((1,), (1,)), ((), ())),
        preferred_element_type=jnp.float32,
    ) + b3_ref[...]
    o_ref[...] = out_row.astype(o_ref.dtype)


def _vmem_bytes_estimate(bt, D, x_itemsize, w_itemsize):
    """Per-grid-step VMEM footprint, including lane/sublane layout padding."""
    lanes_D = _round_up(D, 128)
    # Pipelined block buffers (double-buffered by BlockSpec).
    x_blocks = 2 * _round_up(bt, 8) * lanes_D * x_itemsize
    out_blocks = 2 * 8 * bt * 4                                   # (1,bt) pads to 8 sublanes
    w_blocks = 2 * (_round_up(D, 16) * 128 * w_itemsize           # w1 -> 128 lanes
                    + 64 * 128 * w_itemsize                       # w2 -> 128 lanes
                    + 4 * 8 * 128 * 4)                            # b1,b2,w3,b3 rows (f32)
    # In-kernel intermediates materialised in VMEM at large bt.
    inter = (bt * lanes_D * 2              # x cast to bf16
             + bt * 128 * (4 + 2)          # h1 f32 + bf16 (64 lanes pad to 128)
             + bt * 128 * 4                # h2 f32 (32 lanes pad to 128)
             + 32 * bt * 4                 # possible (32, bt) relayout of h2
             + 8 * bt * 4)                 # (1, bt) out row
    return x_blocks + out_blocks + w_blocks + inter + (2 << 20)   # Mosaic scratch slack


def _vmem_budget_bytes():
    """Generation-aware scoped-VMEM budget (per TensorCore)."""
    try:
        cap = int(pltpu.get_tpu_info().vmem_capacity_bytes)
    except Exception:
        cap = 64 << 20          # conservative: v7x has 64 MiB per TensorCore
    # Leave headroom for Mosaic internals: ~48 MiB on v7x, ~96 MiB on v5e/v6e.
    return (cap * 3) // 4


def _auto_batch_tile(B, D, x_itemsize, w_itemsize, vmem_budget,
                     target_x_bytes=4 << 20):
    """Batch tile: big enough that the streamed x DMA dominates the ~0.35us/step
    overhead, small enough to fit the padded footprint in the VMEM budget, and
    leaving >= 2 tiles for large batches so v7x's two TCs both get work."""
    lanes_D = _round_up(D, 128)
    bt = max(128, _round_down(target_x_bytes // (lanes_D * x_itemsize), 128))
    Bp = _round_up(max(B, 1), 128)
    bt = min(bt, Bp)                                    # don't overshoot small batches
    if Bp >= 1024:                                      # >=2 tiles for v7x megacore
        bt = min(bt, _round_up(pl.cdiv(Bp, 2), 128))
    while bt > 128 and _vmem_bytes_estimate(bt, D, x_itemsize, w_itemsize) > vmem_budget:
        bt -= 128
    return bt


def latency_mlp_forward(x, params, *, batch_tile=None, use_bf16=True,
                        xla_fallback_max_batch=0):
    """x: (B, D) float32. params: w1 (D,64), b1 (1,64), w2 (64,32), b2 (1,32),
    w3 (32,1), b3 (1,1).  Returns (B, 1) float32."""
    B, D = x.shape
    x = x.astype(jnp.float32)

    # Tiny-batch serving: fixed pallas_call launch cost + row padding dominates,
    # plain XLA matmuls win.  Disabled (=0) by default so the Pallas path runs.
    if B <= xla_fallback_max_batch:
        h1 = jnp.maximum(x @ params["w1"] + params["b1"].reshape(1, 64), 0.0)
        h2 = jnp.maximum(h1 @ params["w2"] + params["b2"].reshape(1, 32), 0.0)
        return h2 @ params["w3"].reshape(32, 1) + params["b3"].reshape(1, 1)

    w_dtype = jnp.bfloat16 if use_bf16 else jnp.float32
    w_itemsize = jnp.dtype(w_dtype).itemsize
    x_itemsize = 4   # x is streamed in f32 and cast in-kernel

    vmem_budget = _vmem_budget_bytes()
    if batch_tile is None:
        bt = _auto_batch_tile(B, D, x_itemsize, w_itemsize, vmem_budget)
    else:
        bt = max(128, _round_up(batch_tile, 128))

    # No wrapper-side pad/cast HBM pass on x for real batches: ragged last blocks
    # are safe because rows are independent and the tail is sliced off below.
    # Only tiny batches (B < 128) are padded (negligible bytes).
    if B < 128:
        x_in = jnp.pad(x, ((0, bt - B), (0, 0)))
    else:
        x_in = x
    num_tiles = pl.cdiv(x_in.shape[0], bt)

    w1 = params["w1"].astype(w_dtype)
    w2 = params["w2"].astype(w_dtype)
    b1 = params["b1"].astype(jnp.float32).reshape(1, 64)
    b2 = params["b2"].astype(jnp.float32).reshape(1, 32)
    w3 = params["w3"].astype(jnp.float32).reshape(1, 32)   # row layout for layer 3
    b3 = params["b3"].astype(jnp.float32).reshape(1, 1)

    vmem_est = _vmem_bytes_estimate(bt, D, x_itemsize, w_itemsize)
    vmem_limit = None
    if vmem_est > (16 << 20):          # above the smallest (v5e) scoped default
        vmem_limit = int(min(max(vmem_est * 5 // 4, 32 << 20), vmem_budget))

    flops = 2 * B * (D * 64 + 64 * 32 + 32)
    bytes_accessed = (x_in.size * 4 + (w1.size + w2.size) * w_itemsize
                      + (b1.size + b2.size + w3.size + b3.size) * 4
                      + num_tiles * bt * 4)

    out_slab = pl.pallas_call(
        mlp_kernel,
        out_shape=jax.ShapeDtypeStruct((num_tiles, bt), jnp.float32),
        grid_spec=pltpu.PrefetchScalarGridSpec(
            num_scalar_prefetch=0,
            grid=(num_tiles,),
            in_specs=[
                pl.BlockSpec((bt, D), lambda i: (i, 0)),    # streamed f32 batch tile
                pl.BlockSpec(w1.shape, lambda i: (0, 0)),   # weights resident in VMEM
                pl.BlockSpec(b1.shape, lambda i: (0, 0)),
                pl.BlockSpec(w2.shape, lambda i: (0, 0)),
                pl.BlockSpec(b2.shape, lambda i: (0, 0)),
                pl.BlockSpec(w3.shape, lambda i: (0, 0)),
                pl.BlockSpec(b3.shape, lambda i: (0, 0)),
            ],
            out_specs=pl.BlockSpec((1, bt), lambda i: (i, 0)),  # lane-dense row
        ),
        compiler_params=pltpu.CompilerParams(
            dimension_semantics=("parallel",),   # shards tiles across v7x's 2 TCs
            vmem_limit_bytes=vmem_limit,
        ),
        cost_estimate=pl.CostEstimate(
            flops=flops, transcendentals=0, bytes_accessed=bytes_accessed),
    )(x_in, w1, b1, w2, b2, w3, b3)

    # (num_tiles, bt) row-major is exactly batch order; drop ragged/padded tail rows.
    return out_slab.reshape(num_tiles * bt, 1)[:B]


def init_params(key, input_dim):
    """Deterministic init matching the PyTorch module's shapes (weight.T layout)."""
    k = jax.random.split(key, 6)

    def uniform(k_, shape, fan_in):
        bound = 1.0 / jnp.sqrt(fan_in)
        return jax.random.uniform(k_, shape, jnp.float32, -bound, bound)

    return {
        "w1": uniform(k[0], (input_dim, 64), input_dim),
        "b1": uniform(k[1], (1, 64), input_dim),
        "w2": uniform(k[2], (64, 32), 64),
        "b2": uniform(k[3], (1, 32), 64),
        "w3": uniform(k[4], (32, 1), 32),
        "b3": uniform(k[5], (1, 1), 32),
    }


def reference_forward(x, p):
    h1 = jnp.maximum(x @ p["w1"] + p["b1"], 0.0)
    h2 = jnp.maximum(h1 @ p["w2"] + p["b2"], 0.0)
    return h2 @ p["w3"] + p["b3"]


if __name__ == "__main__":
    key = jax.random.PRNGKey(0)
    input_dim = 32
    batch = 16

    kx, kp, kx2 = jax.random.split(key, 3)
    x = jax.random.normal(kx, (batch, input_dim), jnp.float32)
    params = init_params(kp, input_dim)

    ref = reference_forward(x, params)

    # Exact-semantics check (all-f32 path through the Pallas kernel).
    out_f32 = jax.block_until_ready(latency_mlp_forward(x, params, use_bf16=False))
    assert out_f32.shape == (batch, 1)
    assert jnp.allclose(out_f32, ref, atol=1e-4, rtol=1e-4), "f32 mismatch vs reference"

    # Fast path: bf16 weights + in-kernel bf16 cast of x, f32 accumulation.
    out = jax.block_until_ready(latency_mlp_forward(x, params, use_bf16=True))
    assert out.shape == (batch, 1)
    assert jnp.allclose(out, ref, atol=5e-2, rtol=5e-2), "bf16 mismatch vs reference"

    # Multi-tile grid with a ragged (unpadded) last block: exercises the
    # no-wrapper-pad path.
    batch2 = 300
    x2 = jax.random.normal(kx2, (batch2, input_dim), jnp.float32)
    ref2 = reference_forward(x2, params)
    out2 = jax.block_until_ready(
        latency_mlp_forward(x2, params, use_bf16=False, batch_tile=128))
    assert out2.shape == (batch2, 1)
    assert jnp.allclose(out2, ref2, atol=1e-4, rtol=1e-4), "ragged-tile mismatch"

    print("KERNEL_OK")
</pallas_src>

<mosaic_0001>
module attributes {stable_mosaic.version = 11 : i64} {
  func.func @mlp_kernel(%arg0: i32, %arg1: memref<128x32xf32, #tpu.memory_space<vmem>>, %arg2: memref<32x64xf32, #tpu.memory_space<vmem>>, %arg3: memref<1x64xf32, #tpu.memory_space<vmem>>, %arg4: memref<64x32xf32, #tpu.memory_space<vmem>>, %arg5: memref<1x32xf32, #tpu.memory_space<vmem>>, %arg6: memref<1x32xf32, #tpu.memory_space<vmem>>, %arg7: memref<1x1xf32, #tpu.memory_space<vmem>>, %arg8: memref<1x128xf32, #tpu.memory_space<vmem>>) attributes {dimension_semantics = [#tpu.dimension_semantics<parallel>], iteration_bounds = array<i64: 1>, scalar_prefetch = 0 : i64, scratch_operands = 0 : i64, tpu.core_type = #tpu.core_type<tc>, window_params = [{transform_indices = @transform_0, window_bounds = array<i64: 128, 32>}, {pipeline_mode = #tpu.pipeline_mode<synchronous>, transform_indices = @transform_1, window_bounds = array<i64: 32, 64>}, {pipeline_mode = #tpu.pipeline_mode<synchronous>, transform_indices = @transform_2, window_bounds = array<i64: 1, 64>}, {pipeline_mode = #tpu.pipeline_mode<synchronous>, transform_indices = @transform_3, window_bounds = array<i64: 64, 32>}, {pipeline_mode = #tpu.pipeline_mode<synchronous>, transform_indices = @transform_4, window_bounds = array<i64: 1, 32>}, {pipeline_mode = #tpu.pipeline_mode<synchronous>, transform_indices = @transform_5, window_bounds = array<i64: 1, 32>}, {pipeline_mode = #tpu.pipeline_mode<synchronous>, transform_indices = @transform_6, window_bounds = array<i64: 1, 1>}, {transform_indices = @transform_7, window_bounds = array<i64: 1, 128>}]} {
    %c0 = arith.constant 0 : index
    %c0_0 = arith.constant 0 : index
    %0 = vector.load %arg1[%c0, %c0_0] : memref<128x32xf32, #tpu.memory_space<vmem>>, vector<128x32xf32>
    %c0_1 = arith.constant 0 : index
    %c0_2 = arith.constant 0 : index
    %1 = vector.load %arg2[%c0_1, %c0_2] : memref<32x64xf32, #tpu.memory_space<vmem>>, vector<32x64xf32>
    %cst = arith.constant dense<0.000000e+00> : vector<128x64xf32>
    %2 = tpu.matmul %0, %1, %cst {dimension_numbers = #tpu.dot_dimension_numbers<[1], [0], [0], [1], [0, 0, 1, 1], [], []>} : vector<128x32xf32>, vector<32x64xf32>, vector<128x64xf32> -> vector<128x64xf32>
    %c0_3 = arith.constant 0 : index
    %c0_4 = arith.constant 0 : index
    %3 = vector.load %arg3[%c0_3, %c0_4] : memref<1x64xf32, #tpu.memory_space<vmem>>, vector<1x64xf32>
    %4 = vector.broadcast %3 : vector<1x64xf32> to vector<128x64xf32>
    %5 = arith.addf %2, %4 : vector<128x64xf32>
    %cst_5 = arith.constant 0.000000e+00 : f32
    %6 = vector.broadcast %cst_5 : f32 to vector<128x64xf32>
    %7 = arith.maximumf %5, %6 : vector<128x64xf32>
    %c0_6 = arith.constant 0 : index
    %c0_7 = arith.constant 0 : index
    %8 = vector.load %arg4[%c0_6, %c0_7] : memref<64x32xf32, #tpu.memory_space<vmem>>, vector<64x32xf32>
    %cst_8 = arith.constant dense<0.000000e+00> : vector<128x32xf32>
    %9 = tpu.matmul %7, %8, %cst_8 {dimension_numbers = #tpu.dot_dimension_numbers<[1], [0], [0], [1], [0, 0, 1, 1], [], []>} : vector<128x64xf32>, vector<64x32xf32>, vector<128x32xf32> -> vector<128x32xf32>
    %c0_9 = arith.constant 0 : index
    %c0_10 = arith.constant 0 : index
    %10 = vector.load %arg5[%c0_9, %c0_10] : memref<1x32xf32, #tpu.memory_space<vmem>>, vector<1x32xf32>
    %11 = vector.broadcast %10 : vector<1x32xf32> to vector<128x32xf32>
    %12 = arith.addf %9, %11 : vector<128x32xf32>
    %cst_11 = arith.constant 0.000000e+00 : f32
    %13 = vector.broadcast %cst_11 : f32 to vector<128x32xf32>
    %14 = arith.maximumf %12, %13 : vector<128x32xf32>
    %c0_12 = arith.constant 0 : index
    %c0_13 = arith.constant 0 : index
    %15 = vector.load %arg6[%c0_12, %c0_13] : memref<1x32xf32, #tpu.memory_space<vmem>>, vector<1x32xf32>
    %cst_14 = arith.constant dense<0.000000e+00> : vector<1x128xf32>
    %16 = tpu.matmul %15, %14, %cst_14 {dimension_numbers = #tpu.dot_dimension_numbers<[1], [1], [0], [0], [0, 0, 1, 0], [], []>} : vector<1x32xf32>, vector<128x32xf32>, vector<1x128xf32> -> vector<1x128xf32>
    %c0_15 = arith.constant 0 : index
    %c0_16 = arith.constant 0 : index
    %17 = vector.load %arg7[%c0_15, %c0_16] : memref<1x1xf32, #tpu.memory_space<vmem>>, vector<1x1xf32>
    %18 = vector.broadcast %17 : vector<1x1xf32> to vector<1x128xf32>
    %19 = arith.addf %16, %18 : vector<1x128xf32>
    %c0_17 = arith.constant 0 : index
    %c0_18 = arith.constant 0 : index
    %20 = vector.load %arg8[%c0_17, %c0_18] : memref<1x128xf32, #tpu.memory_space<vmem>>, vector<1x128xf32>
    tpu.vector_store %arg8[%c0_17, %c0_18], %19 {strides = array<i32>} : memref<1x128xf32, #tpu.memory_space<vmem>>, vector<1x128xf32>,
    return
  }
  func.func @transform_0(%arg0: i32) -> (i32, i32) {
    %c0_i32 = arith.constant 0 : i32
    %c0_i32_0 = arith.constant 0 : i32
    return %arg0, %c0_i32 : i32, i32
  }
  func.func @transform_1(%arg0: i32) -> (i32, i32) {
    %c0_i32 = arith.constant 0 : i32
    %c0_i32_0 = arith.constant 0 : i32
    %c0_i32_1 = arith.constant 0 : i32
    return %c0_i32, %c0_i32_0 : i32, i32
  }
  func.func @transform_2(%arg0: i32) -> (i32, i32) {
    %c0_i32 = arith.constant 0 : i32
    %c0_i32_0 = arith.constant 0 : i32
    %c0_i32_1 = arith.constant 0 : i32
    return %c0_i32, %c0_i32_0 : i32, i32
  }
  func.func @transform_3(%arg0: i32) -> (i32, i32) {
    %c0_i32 = arith.constant 0 : i32
    %c0_i32_0 = arith.constant 0 : i32
    %c0_i32_1 = arith.constant 0 : i32
    return %c0_i32, %c0_i32_0 : i32, i32
  }
  func.func @transform_4(%arg0: i32) -> (i32, i32) {
    %c0_i32 = arith.constant 0 : i32
    %c0_i32_0 = arith.constant 0 : i32
    %c0_i32_1 = arith.constant 0 : i32
    return %c0_i32, %c0_i32_0 : i32, i32
  }
  func.func @transform_5(%arg0: i32) -> (i32, i32) {
    %c0_i32 = arith.constant 0 : i32
    %c0_i32_0 = arith.constant 0 : i32
    %c0_i32_1 = arith.constant 0 : i32
    return %c0_i32, %c0_i32_0 : i32, i32
  }
  func.func @transform_6(%arg0: i32) -> (i32, i32) {
    %c0_i32 = arith.constant 0 : i32
    %c0_i32_0 = arith.constant 0 : i32
    %c0_i32_1 = arith.constant 0 : i32
    return %c0_i32, %c0_i32_0 : i32, i32
  }
  func.func @transform_7(%arg0: i32) -> (i32, i32) {
    %c0_i32 = arith.constant 0 : i32
    %c0_i32_0 = arith.constant 0 : i32
    return %arg0, %c0_i32 : i32, i32
  }
}

</mosaic_0001>

<llo_original>
// kernel: tpu_custom_call.1
$region0: #{tpu_custom_call.1}
  #allocation0 [shape = 'u32[]', space=smem, size = 0x4, offset = 0x4, fixed_abs, tag = 'smem constant byte address 0x4 - core index']
  #allocation1 [shape = 'u32[144,128]{1,0:T(1,128)}', space=vmem, size = 0x12000, scoped, tag = 'internal scratch']
  #allocation2 [shape = 'f32[1,1]{1,0:T(1,128)S(1)}', space=vmem, size = 0x200, scoped, tag = 'scoped memory for tpu_custom_call.1']
  %s0 = inlined_call_operand.vmem [shape: f32[128,32], index: 0, kind: input, shape index: {}]
  %s1 = inlined_call_operand.vmem [shape: f32[32,64], index: 1, kind: input, shape index: {}]
  %s2 = inlined_call_operand.vmem [shape: f32[1,64], index: 2, kind: input, shape index: {}]
  %s3 = inlined_call_operand.vmem [shape: f32[64,32], index: 3, kind: input, shape index: {}]
  %s4 = inlined_call_operand.vmem [shape: f32[1,32], index: 4, kind: input, shape index: {}]
  %s5 = inlined_call_operand.vmem [shape: f32[1,32], index: 5, kind: input, shape index: {}]
  %s6 = inlined_call_operand.<no memory space> [shape: f32[1,1], index: 6, kind: input, shape index: {}]
  %s7 = inlined_call_operand.hbm [shape: f32[1,128], index: 7, kind: output, shape index: {}]
  %s8 = sld [smem:[#allocation0]]
  $region38: #{tpu_custom_call.1} parent=0
    _
  %s10 = ssub.s32 1, %s8
  %s11 = scalar_select 0, %s10, %s8
  %v12 = vstv %s6
  %13 = vst [vmem:[#allocation2] sm:$0x1] %v12
  $region1: #{tpu_custom_call.1} parent=0
    #allocation3 [shape = 'u8[512]{0}', space=vmem, size = 0x400, scoped, tag = 'output window, operand 0, single buffered']
    #allocation4 [shape = 's32[1]{0}', space=sflag, size = 0x4, scoped, tag = 'scoped memory for tpu_custom_call.1']
    %14 = vsyncpa [#allocation4], 0
    // Predicated region
    $region2: #{tpu_custom_call.1} parent=1 // pred_check
      _
    $region3: #{tpu_custom_call.1} parent=1 // pred_check_branch
      %16 = sbr.rel (0) target = $region5
    $region4: #{tpu_custom_call.1} parent=1 // pred_region
      _
    $region5: #{tpu_custom_call.1} parent=1 // pred_fallthru
      _
    // Predicated region
    $region6: #{tpu_custom_call.1} parent=1 // pred_check
      _
    $region7: #{tpu_custom_call.1} parent=1 // pred_check_branch
      %18 = sbr.rel (0) target = $region9
    $region8: #{tpu_custom_call.1} parent=1 // pred_region
      _
    $region9: #{tpu_custom_call.1} parent=1 // pred_fallthru
      _
    // Predicated region
    $region10: #{tpu_custom_call.1} parent=1 // pred_check
      _
    $region11: #{tpu_custom_call.1} parent=1 // pred_check_branch
      %20 = sbr.rel (0) target = $region13
    $region12: #{tpu_custom_call.1} parent=1 // pred_region
      _
    $region13: #{tpu_custom_call.1} parent=1 // pred_fallthru
      _
    // Predicated region
    $region14: #{tpu_custom_call.1} parent=1 // pred_check
      _
    $region15: #{tpu_custom_call.1} parent=1 // pred_check_branch
      %22 = sbr.rel (0) target = $region17
    $region16: #{tpu_custom_call.1} parent=1 // pred_region
      _
    $region17: #{tpu_custom_call.1} parent=1 // pred_fallthru
      _
    // Predicated region
    $region18: #{tpu_custom_call.1} parent=1 // pred_check
      _
    $region19: #{tpu_custom_call.1} parent=1 // pred_check_branch
      %24 = sbr.rel (0) target = $region21
    $region20: #{tpu_custom_call.1} parent=1 // pred_region
      _
    $region21: #{tpu_custom_call.1} parent=1 // pred_fallthru
      _
    // Predicated region
    $region22: #{tpu_custom_call.1} parent=1 // pred_check
      _
    $region23: #{tpu_custom_call.1} parent=1 // pred_check_branch
      %26 = sbr.rel (0) target = $region25
    $region24: #{tpu_custom_call.1} parent=1 // pred_region
      _
    $region25: #{tpu_custom_call.1} parent=1 // pred_fallthru
      _
    // Predicated region
    $region26: #{tpu_custom_call.1} parent=1 // pred_check
      _
    $region27: #{tpu_custom_call.1} parent=1 // pred_check_branch
      %28 = sbr.rel (0) target = $region29
    $region28: #{tpu_custom_call.1} parent=1 // pred_region
      _
    $region29: #{tpu_custom_call.1} parent=1 // pred_fallthru
      _
    %v29 = vld [vmem:[%s0] sm:$0xff]
    %v30 = vld [vmem:[%s0 + $0x8] sm:$0xff]
    %v31 = vld [vmem:[%s0 + $0x10] sm:$0xff]
    %v32 = vld [vmem:[%s0 + $0x18] sm:$0xff]
    %v33 = vld [vmem:[%s0 + $0x20] sm:$0xff]
    %v34 = vld [vmem:[%s0 + $0x28] sm:$0xff]
    %v35 = vld [vmem:[%s0 + $0x30] sm:$0xff]
    %v36 = vld [vmem:[%s0 + $0x38] sm:$0xff]
    %v37 = vld [vmem:[%s0 + $0x40] sm:$0xff]
    %v38 = vld [vmem:[%s0 + $0x48] sm:$0xff]
    %v39 = vld [vmem:[%s0 + $0x50] sm:$0xff]
    %v40 = vld [vmem:[%s0 + $0x58] sm:$0xff]
    %v41 = vld [vmem:[%s0 + $0x60] sm:$0xff]
    %v42 = vld [vmem:[%s0 + $0x68] sm:$0xff]
    %v43 = vld [vmem:[%s0 + $0x70] sm:$0xff]
    %v44 = vld [vmem:[%s0 + $0x78] sm:$0xff]
    %v45 = vld [vmem:[%s1] sm:$0xff]
    %v46 = vld [vmem:[%s1 + $0x8] sm:$0xff]
    %v47 = vld [vmem:[%s1 + $0x10] sm:$0xff]
    %v48 = vld [vmem:[%s1 + $0x18] sm:$0xff]
    %v49 = vld [vmem:[%s2] sm:$0x1]
    %v51 = vlaneseq
    %v52 = vshrl.u32 %v51, 7
    %v53 = vsub.s32 0, %v52
    %v54 = vrot.slane %v49, %v53
    %vm56 = vcmask 261120
    %v58 = vsel %vm56, %v29, 0
    %v61 = vsel %vm56, %v30, 0
    %v64 = vsel %vm56, %v31, 0
    %v67 = vsel %vm56, %v32, 0
    %v70 = vsel %vm56, %v33, 0
    %v73 = vsel %vm56, %v34, 0
    %v76 = vsel %vm56, %v35, 0
    %v79 = vsel %vm56, %v36, 0
    %v82 = vsel %vm56, %v37, 0
    %v85 = vsel %vm56, %v38, 0
    %v88 = vsel %vm56, %v39, 0
    %v91 = vsel %vm56, %v40, 0
    %v94 = vsel %vm56, %v41, 0
    %v97 = vsel %vm56, %v42, 0
    %v100 = vsel %vm56, %v43, 0
    %v103 = vsel %vm56, %v44, 0
    %105 = vmatprep.subr.mxu0 0.0
    %106 = vmatpush1.msra.mxu0 0.0
    %107 = vmatprep.subr.mxu0 0.0
    %108 = vmatpush1.msra.mxu0 0.0
    %109 = vmatprep.subr.mxu0 0.0
    %110 = vmatpush1.msra.mxu0 0.0
    %111 = vmatprep.subr.mxu0 0.0
    %112 = vmatpush1.msra.mxu0 0.0
    %113 = vmatprep.subr.mxu0 0.0
    %114 = vmatpush1.msra.mxu0 0.0
    %115 = vmatprep.subr.mxu0 0.0
    %116 = vmatpush1.msra.mxu0 0.0
    %117 = vmatprep.subr.mxu0 0.0
    %118 = vmatpush1.msra.mxu0 0.0
    %119 = vmatprep.subr.mxu0 0.0
    %120 = vmatpush1.msra.mxu0 0.0
    %121 = vmatprep.subr.mxu0 0.0
    %122 = vmatpush1.msra.mxu0 0.0
    %123 = vmatprep.subr.mxu0 0.0
    %124 = vmatpush1.msra.mxu0 0.0
    %125 = vmatprep.subr.mxu0 0.0
    %126 = vmatpush1.msra.mxu0 0.0
    %127 = vmatprep.subr.mxu0 0.0
    %128 = vmatpush1.msra.mxu0 0.0
    %129 = vmatprep.subr.mxu0 0.0
    %130 = vmatpush1.msra.mxu0 %v48
    %131 = vmatprep.subr.mxu0 0.0
    %132 = vmatpush1.msra.mxu0 %v47
    %133 = vmatprep.subr.mxu0 0.0
    %134 = vmatpush1.msra.mxu0 %v46
    %135 = vmatprep.subr.mxu0 0.0
    %136 = vmatpush1.msra.mxu0 %v45
    %137 = vmatprep.subr.mxu0 0.0
    %138 = vmatpush2.msra.mxu0 0.0
    %139 = vmatprep.subr.mxu0 0.0
    %140 = vmatpush2.msra.mxu0 0.0
    %141 = vmatprep.subr.mxu0 0.0
    %142 = vmatpush2.msra.mxu0 0.0
    %143 = vmatprep.subr.mxu0 0.0
    %144 = vmatpush2.msra.mxu0 0.0
    %145 = vmatprep.subr.mxu0 0.0
    %146 = vmatpush2.msra.mxu0 0.0
    %147 = vmatprep.subr.mxu0 0.0
    %148 = vmatpush2.msra.mxu0 0.0
    %149 = vmatprep.subr.mxu0 0.0
    %150 = vmatpush2.msra.mxu0 0.0
    %151 = vmatprep.subr.mxu0 0.0
    %152 = vmatpush2.msra.mxu0 0.0
    %153 = vmatprep.subr.mxu0 0.0
    %154 = vmatpush2.msra.mxu0 0.0
    %155 = vmatprep.subr.mxu0 0.0
    %156 = vmatpush2.msra.mxu0 0.0
    %157 = vmatprep.subr.mxu0 0.0
    %158 = vmatpush2.msra.mxu0 0.0
    %159 = vmatprep.subr.mxu0 0.0
    %160 = vmatpush2.msra.mxu0 0.0
    %161 = vmatprep.subr.mxu0 0.0
    %162 = vmatpush2.msra.mxu0 0.0
    %163 = vmatprep.subr.mxu0 0.0
    %164 = vmatpush2.msra.mxu0 0.0
    %165 = vmatprep.subr.mxu0 0.0
    %166 = vmatpush2.msra.mxu0 0.0
    %167 = vmatprep.subr.mxu0 0.0
    %168 = vmatpush2.msra.mxu0 0.0
    %169 = vmatprep.mubr.f32.mxu0 0.0
    %170 = vmatmul.mubr.f32.gmra.mxu0 %v58
    %v171 = vpop.f32.mrf.mxu0
    %v172 = vadd.f32 %v54, %v171
    %v173 = vpop.f32.mrf.mxu0
    %174 = vmatprep.mubr.f32.mxu0 0.0
    %175 = vmatmul.mubr.f32.gmra.mxu0 %v61
    %v176 = vpop.f32.mrf.mxu0
    %v177 = vadd.f32 %v54, %v176
    %v178 = vpop.f32.mrf.mxu0
    %179 = vmatprep.mubr.f32.mxu0 0.0
    %180 = vmatmul.mubr.f32.gmra.mxu0 %v64
    %v181 = vpop.f32.mrf.mxu0
    %v182 = vadd.f32 %v54, %v181
    %v183 = vpop.f32.mrf.mxu0
    %184 = vmatprep.mubr.f32.mxu0 0.0
    %185 = vmatmul.mubr.f32.gmra.mxu0 %v67
    %v186 = vpop.f32.mrf.mxu0
    %v187 = vadd.f32 %v54, %v186
    %v188 = vpop.f32.mrf.mxu0
    %189 = vmatprep.mubr.f32.mxu0 0.0
    %190 = vmatmul.mubr.f32.gmra.mxu0 %v70
    %v191 = vpop.f32.mrf.mxu0
    %v192 = vadd.f32 %v54, %v191
    %v193 = vpop.f32.mrf.mxu0
    %194 = vmatprep.mubr.f32.mxu0 0.0
    %195 = vmatmul.mubr.f32.gmra.mxu0 %v73
    %v196 = vpop.f32.mrf.mxu0
    %v197 = vadd.f32 %v54, %v196
    %v198 = vpop.f32.mrf.mxu0
    %199 = vmatprep.mubr.f32.mxu0 0.0
    %200 = vmatmul.mubr.f32.gmra.mxu0 %v76
    %v201 = vpop.f32.mrf.mxu0
    %v202 = vadd.f32 %v54, %v201
    %v203 = vpop.f32.mrf.mxu0
    %204 = vmatprep.mubr.f32.mxu0 0.0
    %205 = vmatmul.mubr.f32.gmra.mxu0 %v79
    %v206 = vpop.f32.mrf.mxu0
    %v207 = vadd.f32 %v54, %v206
    %v208 = vpop.f32.mrf.mxu0
    %209 = vmatprep.mubr.f32.mxu0 0.0
    %210 = vmatmul.mubr.f32.gmra.mxu0 %v82
    %v211 = vpop.f32.mrf.mxu0
    %v212 = vadd.f32 %v54, %v211
    %v213 = vpop.f32.mrf.mxu0
    %214 = vmatprep.mubr.f32.mxu0 0.0
    %215 = vmatmul.mubr.f32.gmra.mxu0 %v85
    %v216 = vpop.f32.mrf.mxu0
    %v217 = vadd.f32 %v54, %v216
    %v218 = vpop.f32.mrf.mxu0
    %219 = vmatprep.mubr.f32.mxu0 0.0
    %220 = vmatmul.mubr.f32.gmra.mxu0 %v88
    %v221 = vpop.f32.mrf.mxu0
    %v222 = vadd.f32 %v54, %v221
    %v223 = vpop.f32.mrf.mxu0
    %224 = vmatprep.mubr.f32.mxu0 0.0
    %225 = vmatmul.mubr.f32.gmra.mxu0 %v91
    %v226 = vpop.f32.mrf.mxu0
    %v227 = vadd.f32 %v54, %v226
    %v228 = vpop.f32.mrf.mxu0
    %229 = vmatprep.mubr.f32.mxu0 0.0
    %230 = vmatmul.mubr.f32.gmra.mxu0 %v94
    %v231 = vpop.f32.mrf.mxu0
    %v232 = vadd.f32 %v54, %v231
    %v233 = vpop.f32.mrf.mxu0
    %234 = vmatprep.mubr.f32.mxu0 0.0
    %235 = vmatmul.mubr.f32.gmra.mxu0 %v97
    %v236 = vpop.f32.mrf.mxu0
    %v237 = vadd.f32 %v54, %v236
    %v238 = vpop.f32.mrf.mxu0
    %239 = vmatprep.mubr.f32.mxu0 0.0
    %240 = vmatmul.mubr.f32.gmra.mxu0 %v100
    %v241 = vpop.f32.mrf.mxu0
    %v242 = vadd.f32 %v54, %v241
    %v243 = vpop.f32.mrf.mxu0
    %244 = vmatprep.mubr.f32.mxu0 0.0
    %245 = vmatmul.mubr.f32.gmra.mxu0 %v103
    %v246 = vpop.f32.mrf.mxu0
    %v247 = vadd.f32 %v54, %v246
    %v248 = vpop.f32.mrf.mxu0
    %249 = vdwg.mxu0
    %v250 = vmax.f32 %v172, 0.0
    %v251 = vmax.f32 %v177, 0.0
    %v252 = vmax.f32 %v182, 0.0
    %v253 = vmax.f32 %v187, 0.0
    %v254 = vmax.f32 %v192, 0.0
    %v255 = vmax.f32 %v197, 0.0
    %v256 = vmax.f32 %v202, 0.0
    %v257 = vmax.f32 %v207, 0.0
    %v258 = vmax.f32 %v212, 0.0
    %v259 = vmax.f32 %v217, 0.0
    %v260 = vmax.f32 %v222, 0.0
    %v261 = vmax.f32 %v227, 0.0
    %v262 = vmax.f32 %v232, 0.0
    %v263 = vmax.f32 %v237, 0.0
    %v264 = vmax.f32 %v242, 0.0
    %v265 = vmax.f32 %v247, 0.0
    %v266 = vld [vmem:[%s3] sm:$0xff]
    %v267 = vld [vmem:[%s3 + $0x8] sm:$0xff]
    %v268 = vld [vmem:[%s3 + $0x10] sm:$0xff]
    %v269 = vld [vmem:[%s3 + $0x18] sm:$0xff]
    %v270 = vld [vmem:[%s3 + $0x20] sm:$0xff]
    %v271 = vld [vmem:[%s3 + $0x28] sm:$0xff]
    %v272 = vld [vmem:[%s3 + $0x30] sm:$0xff]
    %v273 = vld [vmem:[%s3 + $0x38] sm:$0xff]
    %v274 = vld [vmem:[%s4] sm:$0x1]
    %v276 = vlaneseq
    %v277 = vshrl.u32 %v276, 7
    %v278 = vsub.s32 0, %v277
    %v279 = vrot.slane %v274, %v278
    %vm281 = vcmask 523264
    %v283 = vsel %vm281, %v250, 0
    %v286 = vsel %vm281, %v251, 0
    %v289 = vsel %vm281, %v252, 0
    %v292 = vsel %vm281, %v253, 0
    %v295 = vsel %vm281, %v254, 0
    %v298 = vsel %vm281, %v255, 0
    %v301 = vsel %vm281, %v256, 0
    %v304 = vsel %vm281, %v257, 0
    %v307 = vsel %vm281, %v258, 0
    %v310 = vsel %vm281, %v259, 0
    %v313 = vsel %vm281, %v260, 0
    %v316 = vsel %vm281, %v261, 0
    %v319 = vsel %vm281, %v262, 0
    %v322 = vsel %vm281, %v263, 0
    %v325 = vsel %vm281, %v264, 0
    %v328 = vsel %vm281, %v265, 0
    %330 = vmatprep.subr.mxu0 0.0
    %331 = vmatpush1.msra.mxu0 0.0
    %332 = vmatprep.subr.mxu0 0.0
    %333 = vmatpush1.msra.mxu0 0.0
    %334 = vmatprep.subr.mxu0 0.0
    %335 = vmatpush1.msra.mxu0 0.0
    %336 = vmatprep.subr.mxu0 0.0
    %337 = vmatpush1.msra.mxu0 0.0
    %338 = vmatprep.subr.mxu0 0.0
    %339 = vmatpush1.msra.mxu0 0.0
    %340 = vmatprep.subr.mxu0 0.0
    %341 = vmatpush1.msra.mxu0 0.0
    %342 = vmatprep.subr.mxu0 0.0
    %343 = vmatpush1.msra.mxu0 0.0
    %344 = vmatprep.subr.mxu0 0.0
    %345 = vmatpush1.msra.mxu0 0.0
    %346 = vmatprep.subr.mxu0 0.0
    %347 = vmatpush1.msra.mxu0 %v273
    %348 = vmatprep.subr.mxu0 0.0
    %349 = vmatpush1.msra.mxu0 %v272
    %350 = vmatprep.subr.mxu0 0.0
    %351 = vmatpush1.msra.mxu0 %v271
    %352 = vmatprep.subr.mxu0 0.0
    %353 = vmatpush1.msra.mxu0 %v270
    %354 = vmatprep.subr.mxu0 0.0
    %355 = vmatpush1.msra.mxu0 %v269
    %356 = vmatprep.subr.mxu0 0.0
    %357 = vmatpush1.msra.mxu0 %v268
    %358 = vmatprep.subr.mxu0 0.0
    %359 = vmatpush1.msra.mxu0 %v267
    %360 = vmatprep.subr.mxu0 0.0
    %361 = vmatpush1.msra.mxu0 %v266
    %362 = vmatprep.subr.mxu0 0.0
    %363 = vmatpush2.msra.mxu0 0.0
    %364 = vmatprep.subr.mxu0 0.0
    %365 = vmatpush2.msra.mxu0 0.0
    %366 = vmatprep.subr.mxu0 0.0
    %367 = vmatpush2.msra.mxu0 0.0
    %368 = vmatprep.subr.mxu0 0.0
    %369 = vmatpush2.msra.mxu0 0.0
    %370 = vmatprep.subr.mxu0 0.0
    %371 = vmatpush2.msra.mxu0 0.0
    %372 = vmatprep.subr.mxu0 0.0
    %373 = vmatpush2.msra.mxu0 0.0
    %374 = vmatprep.subr.mxu0 0.0
    %375 = vmatpush2.msra.mxu0 0.0
    %376 = vmatprep.subr.mxu0 0.0
    %377 = vmatpush2.msra.mxu0 0.0
    %378 = vmatprep.subr.mxu0 0.0
    %379 = vmatpush2.msra.mxu0 0.0
    %380 = vmatprep.subr.mxu0 0.0
    %381 = vmatpush2.msra.mxu0 0.0
    %382 = vmatprep.subr.mxu0 0.0
    %383 = vmatpush2.msra.mxu0 0.0
    %384 = vmatprep.subr.mxu0 0.0
    %385 = vmatpush2.msra.mxu0 0.0
    %386 = vmatprep.subr.mxu0 0.0
    %387 = vmatpush2.msra.mxu0 0.0
    %388 = vmatprep.subr.mxu0 0.0
    %389 = vmatpush2.msra.mxu0 0.0
    %390 = vmatprep.subr.mxu0 0.0
    %391 = vmatpush2.msra.mxu0 0.0
    %392 = vmatprep.subr.mxu0 0.0
    %393 = vmatpush2.msra.mxu0 0.0
    %394 = vmatprep.mubr.f32.mxu0 0.0
    %395 = vmatmul.mubr.f32.gmra.mxu0 %v283
    %v396 = vpop.f32.mrf.mxu0
    %v397 = vadd.f32 %v279, %v396
    %v398 = vpop.f32.mrf.mxu0
    %399 = vmatprep.mubr.f32.mxu0 0.0
    %400 = vmatmul.mubr.f32.gmra.mxu0 %v286
    %v401 = vpop.f32.mrf.mxu0
    %v402 = vadd.f32 %v279, %v401
    %v403 = vpop.f32.mrf.mxu0
    %404 = vmatprep.mubr.f32.mxu0 0.0
    %405 = vmatmul.mubr.f32.gmra.mxu0 %v289
    %v406 = vpop.f32.mrf.mxu0
    %v407 = vadd.f32 %v279, %v406
    %v408 = vpop.f32.mrf.mxu0
    %409 = vmatprep.mubr.f32.mxu0 0.0
    %410 = vmatmul.mubr.f32.gmra.mxu0 %v292
    %v411 = vpop.f32.mrf.mxu0
    %v412 = vadd.f32 %v279, %v411
    %v413 = vpop.f32.mrf.mxu0
    %414 = vmatprep.mubr.f32.mxu0 0.0
    %415 = vmatmul.mubr.f32.gmra.mxu0 %v295
    %v416 = vpop.f32.mrf.mxu0
    %v417 = vadd.f32 %v279, %v416
    %v418 = vpop.f32.mrf.mxu0
    %419 = vmatprep.mubr.f32.mxu0 0.0
    %420 = vmatmul.mubr.f32.gmra.mxu0 %v298
    %v421 = vpop.f32.mrf.mxu0
    %v422 = vadd.f32 %v279, %v421
    %v423 = vpop.f32.mrf.mxu0
    %424 = vmatprep.mubr.f32.mxu0 0.0
    %425 = vmatmul.mubr.f32.gmra.mxu0 %v301
    %v426 = vpop.f32.mrf.mxu0
    %v427 = vadd.f32 %v279, %v426
    %v428 = vpop.f32.mrf.mxu0
    %429 = vmatprep.mubr.f32.mxu0 0.0
    %430 = vmatmul.mubr.f32.gmra.mxu0 %v304
    %v431 = vpop.f32.mrf.mxu0
    %v432 = vadd.f32 %v279, %v431
    %v433 = vpop.f32.mrf.mxu0
    %434 = vmatprep.mubr.f32.mxu0 0.0
    %435 = vmatmul.mubr.f32.gmra.mxu0 %v307
    %v436 = vpop.f32.mrf.mxu0
    %v437 = vadd.f32 %v279, %v436
    %v438 = vpop.f32.mrf.mxu0
    %439 = vmatprep.mubr.f32.mxu0 0.0
    %440 = vmatmul.mubr.f32.gmra.mxu0 %v310
    %v441 = vpop.f32.mrf.mxu0
    %v442 = vadd.f32 %v279, %v441
    %v443 = vpop.f32.mrf.mxu0
    %444 = vmatprep.mubr.f32.mxu0 0.0
    %445 = vmatmul.mubr.f32.gmra.mxu0 %v313
    %v446 = vpop.f32.mrf.mxu0
    %v447 = vadd.f32 %v279, %v446
    %v448 = vpop.f32.mrf.mxu0
    %449 = vmatprep.mubr.f32.mxu0 0.0
    %450 = vmatmul.mubr.f32.gmra.mxu0 %v316
    %v451 = vpop.f32.mrf.mxu0
    %v452 = vadd.f32 %v279, %v451
    %v453 = vpop.f32.mrf.mxu0
    %454 = vmatprep.mubr.f32.mxu0 0.0
    %455 = vmatmul.mubr.f32.gmra.mxu0 %v319
    %v456 = vpop.f32.mrf.mxu0
    %v457 = vadd.f32 %v279, %v456
    %v458 = vpop.f32.mrf.mxu0
    %459 = vmatprep.mubr.f32.mxu0 0.0
    %460 = vmatmul.mubr.f32.gmra.mxu0 %v322
    %v461 = vpop.f32.mrf.mxu0
    %v462 = vadd.f32 %v279, %v461
    %v463 = vpop.f32.mrf.mxu0
    %464 = vmatprep.mubr.f32.mxu0 0.0
    %465 = vmatmul.mubr.f32.gmra.mxu0 %v325
    %v466 = vpop.f32.mrf.mxu0
    %v467 = vadd.f32 %v279, %v466
    %v468 = vpop.f32.mrf.mxu0
    %469 = vmatprep.mubr.f32.mxu0 0.0
    %470 = vmatmul.mubr.f32.gmra.mxu0 %v328
    %v471 = vpop.f32.mrf.mxu0
    %v472 = vadd.f32 %v279, %v471
    %v473 = vpop.f32.mrf.mxu0
    %474 = vdwg.mxu0
    %v475 = vmax.f32 %v397, 0.0
    %v476 = vmax.f32 %v402, 0.0
    %v477 = vmax.f32 %v407, 0.0
    %v478 = vmax.f32 %v412, 0.0
    %v479 = vmax.f32 %v417, 0.0
    %v480 = vmax.f32 %v422, 0.0
    %v481 = vmax.f32 %v427, 0.0
    %v482 = vmax.f32 %v432, 0.0
    %v483 = vmax.f32 %v437, 0.0
    %v484 = vmax.f32 %v442, 0.0
    %v485 = vmax.f32 %v447, 0.0
    %v486 = vmax.f32 %v452, 0.0
    %v487 = vmax.f32 %v457, 0.0
    %v488 = vmax.f32 %v462, 0.0
    %v489 = vmax.f32 %v467, 0.0
    %v490 = vmax.f32 %v472, 0.0
    %v491 = vld [vmem:[%s5] sm:$0x1]
    %v492 = vld [vmem:[#allocation2] sm:$0x1]
    %494 = vset.pattern.permute.xlu0 0
    %495 = vperm.xlu0 %494, %v492
    %v496 = vpop.permute.xlu0 %495
    %v498 = vlaneseq
    %v499 = vshrl.u32 %v498, 7
    %v500 = vsub.s32 0, %v499
    %v501 = vrot.slane %v496, %v500
    %v503 = vsel %vm56, %v491, 0
    %v506 = vsel %vm56, %v475, 0
    %v509 = vsel %vm56, %v476, 0
    %v512 = vsel %vm56, %v477, 0
    %v515 = vsel %vm56, %v478, 0
    %v518 = vsel %vm56, %v479, 0
    %v521 = vsel %vm56, %v480, 0
    %v524 = vsel %vm56, %v481, 0
    %v527 = vsel %vm56, %v482, 0
    %v530 = vsel %vm56, %v483, 0
    %v533 = vsel %vm56, %v484, 0
    %v536 = vsel %vm56, %v485, 0
    %v539 = vsel %vm56, %v486, 0
    %v542 = vsel %vm56, %v487, 0
    %v545 = vsel %vm56, %v488, 0
    %v548 = vsel %vm56, %v489, 0
    %v551 = vsel %vm56, %v490, 0
    %553 = vmatprep.subr.mxu0 0.0
    %554 = vmatpush1.xpose.msra.mxu0 %v551
    %555 = vmatprep.subr.mxu0 0.0
    %556 = vmatpush1.xpose.msra.mxu0 %v548
    %557 = vmatprep.subr.mxu0 0.0
    %558 = vmatpush1.xpose.msra.mxu0 %v545
    %559 = vmatprep.subr.mxu0 0.0
    %560 = vmatpush1.xpose.msra.mxu0 %v542
    %561 = vmatprep.subr.mxu0 0.0
    %562 = vmatpush1.xpose.msra.mxu0 %v539
    %563 = vmatprep.subr.mxu0 0.0
    %564 = vmatpush1.xpose.msra.mxu0 %v536
    %565 = vmatprep.subr.mxu0 0.0
    %566 = vmatpush1.xpose.msra.mxu0 %v533
    %567 = vmatprep.subr.mxu0 0.0
    %568 = vmatpush1.xpose.msra.mxu0 %v530
    %569 = vmatprep.subr.mxu0 0.0
    %570 = vmatpush1.xpose.msra.mxu0 %v527
    %571 = vmatprep.subr.mxu0 0.0
    %572 = vmatpush1.xpose.msra.mxu0 %v524
    %573 = vmatprep.subr.mxu0 0.0
    %574 = vmatpush1.xpose.msra.mxu0 %v521
    %575 = vmatprep.subr.mxu0 0.0
    %576 = vmatpush1.xpose.msra.mxu0 %v518
    %577 = vmatprep.subr.mxu0 0.0
    %578 = vmatpush1.xpose.msra.mxu0 %v515
    %579 = vmatprep.subr.mxu0 0.0
    %580 = vmatpush1.xpose.msra.mxu0 %v512
    %581 = vmatprep.subr.mxu0 0.0
    %582 = vmatpush1.xpose.msra.mxu0 %v509
    %583 = vmatprep.subr.mxu0 0.0
    %584 = vmatpush1.xpose.msra.mxu0 %v506
    %585 = vmatprep.subr.mxu0 0.0
    %586 = vmatpush2.xpose.msra.mxu0 0.0
    %587 = vmatprep.subr.mxu0 0.0
    %588 = vmatpush2.xpose.msra.mxu0 0.0
    %589 = vmatprep.subr.mxu0 0.0
    %590 = vmatpush2.xpose.msra.mxu0 0.0
    %591 = vmatprep.subr.mxu0 0.0
    %592 = vmatpush2.xpose.msra.mxu0 0.0
    %593 = vmatprep.subr.mxu0 0.0
    %594 = vmatpush2.xpose.msra.mxu0 0.0
    %595 = vmatprep.subr.mxu0 0.0
    %596 = vmatpush2.xpose.msra.mxu0 0.0
    %597 = vmatprep.subr.mxu0 0.0
    %598 = vmatpush2.xpose.msra.mxu0 0.0
    %599 = vmatprep.subr.mxu0 0.0
    %600 = vmatpush2.xpose.msra.mxu0 0.0
    %601 = vmatprep.subr.mxu0 0.0
    %602 = vmatpush2.xpose.msra.mxu0 0.0
    %603 = vmatprep.subr.mxu0 0.0
    %604 = vmatpush2.xpose.msra.mxu0 0.0
    %605 = vmatprep.subr.mxu0 0.0
    %606 = vmatpush2.xpose.msra.mxu0 0.0
    %607 = vmatprep.subr.mxu0 0.0
    %608 = vmatpush2.xpose.msra.mxu0 0.0
    %609 = vmatprep.subr.mxu0 0.0
    %610 = vmatpush2.xpose.msra.mxu0 0.0
    %611 = vmatprep.subr.mxu0 0.0
    %612 = vmatpush2.xpose.msra.mxu0 0.0
    %613 = vmatprep.subr.mxu0 0.0
    %614 = vmatpush2.xpose.msra.mxu0 0.0
    %615 = vmatprep.subr.mxu0 0.0
    %616 = vmatpush2.xpose.msra.mxu0 0.0
    %617 = vmatprep.mubr.f32.mxu0 0.0
    %618 = vmatmul.mubr.f32.gmra.mxu0 %v503
    %v619 = vpop.f32.mrf.mxu0
    %v620 = vadd.f32 %v501, %v619
    %v621 = vpop.f32.mrf.mxu0
    %622 = vdwg.mxu0
    %623 = vst [vmem:[#allocation3] sm:$0x1] %v620
    // Predicated region
    $region30: #{tpu_custom_call.1} parent=1 // pred_check
      _
    $region31: #{tpu_custom_call.1} parent=1 // pred_check_branch
      %625 = sbr.rel (0) target = $region33
    $region32: #{tpu_custom_call.1} parent=1 // pred_region
      %s627 = ssub.s32 16, 16
      %628 = vsyncadd [#allocation4], %s627
      %s630 = sshll.u32 [#allocation3], 4
      %s631 = int_to_ptr.vmem [resolvable:$true] %s630
      %633 = dma.vmem_to_hbm [thread:$0]  %s631, 16, %s7, [#allocation4]
    $region33: #{tpu_custom_call.1} parent=1 // pred_fallthru
      _
    // Predicated region
    $region34: #{tpu_custom_call.1} parent=1 // pred_check
      _
    $region35: #{tpu_custom_call.1} parent=1 // pred_check_branch
      %635 = sbr.rel (0) target = $region37
    $region36: #{tpu_custom_call.1} parent=1 // pred_region
      %636 = dma.done [#allocation4], 16
    $region37: #{tpu_custom_call.1} parent=1 // pred_fallthru
      _
    %637 = vsyncpa [#allocation4], 1

</llo_original>
